<compile_context>
chip_gen: v6e
topology: v6e:2x2x1
jax: 0.10.0
libtpu: 0.0.40
codegen_flags: <defaults>
</compile_context>

<pallas_src>
import functools

import jax
import jax.numpy as jnp
from jax.experimental import pallas as pl
from jax.experimental.pallas import tpu as pltpu


def _round_up(x, m):
    return (x + m - 1) // m * m


def _qkv_fused_kernel(x_ref, w_ref, b_ref, q_ref, k_ref, v_ref, *, wq_w, wk_w):
    """One fused matmul per tile; slice the packed result into q/k/v stores.

    x_ref: (pm, pack*C)            packed voxel rows
    w_ref: (pack*C, pack*(2Fk+Fv)) fused block-diagonal weights
    b_ref: (1, pack*(2Fk+Fv))      fused packed bias
    q/k/v_ref: (pm, pack*Fk/Fk/Fv) lane-dense output tiles
    """
    y = jnp.dot(x_ref[...], w_ref[...], preferred_element_type=jnp.float32)
    y = y + b_ref[...]
    q_ref[...] = y[:, :wq_w].astype(q_ref.dtype)
    k_ref[...] = y[:, wq_w:wq_w + wk_w].astype(k_ref.dtype)
    v_ref[...] = y[:, wq_w + wk_w:].astype(v_ref.dtype)


@functools.partial(jax.jit, static_argnames=("row_tile",))
def compute_qkv_3d_same(x, wq, bq, wk, bk, wv, bv, *, row_tile=8192):
    """x: [B, C, D, H, W] (NCDHW, like PyTorch Conv3d input).

    wq/wk: [C, Fk], wv: [C, Fv] (transposed 1x1x1 conv weights);
    bq/bk: [Fk], bv: [Fv].

    Returns (q, k, v) with shapes [B, D, H, W, Fk/Fk/Fv] (channels last),
    matching `conv(x).permute(0, 2, 3, 4, 1)` in the PyTorch module.

    row_tile: target number of voxels processed per grid step (sweepable).
    """
    B, C, D, H, W = x.shape
    Fk = wq.shape[1]
    Fv = wv.shape[1]
    M = B * D * H * W

    # Lane-pack factor: pack `pack` consecutive voxels into one kernel row so
    # each output block is a 128-lane-dense store.  Falls back to pack=1 (plain
    # fused matmul) if the filter counts don't divide 128.
    fmax = max(Fk, Fv)
    if fmax <= 128 and 128 % Fk == 0 and 128 % Fv == 0:
        pack = 128 // fmax
    else:
        pack = 1

    # Packed-row tile: multiple of 8, clamped to the (padded) problem size.
    pm = max(8, row_tile // pack)
    pm = min(pm, _round_up(pl.cdiv(M, pack), 8))
    pm = _round_up(pm, 8)
    Mp = _round_up(M, pack * pm)          # padded voxel count
    n_rows = Mp // pack                   # packed rows
    grid = (n_rows // pm,)

    # NCDHW -> NDHWC -> [M, C] -> packed [n_rows, pack*C] (bytewise identical).
    x2d = jnp.transpose(x, (0, 2, 3, 4, 1)).reshape(M, C)
    if Mp != M:
        x2d = jnp.pad(x2d, ((0, Mp - M), (0, 0)))
    x_pk = x2d.reshape(n_rows, pack * C)

    # Fused block-diagonal ("voxel-packed") weights and packed biases.
    # kron(I_pack, w) puts `pack` copies of w on the block diagonal so that
    # x_pk @ w_bd reproduces the per-voxel 1x1x1 conv, packed 128-lane wide.
    eye = jnp.eye(pack, dtype=wq.dtype)
    w_all = jnp.concatenate(
        [jnp.kron(eye, wq), jnp.kron(eye, wk), jnp.kron(eye, wv)], axis=1)
    b_all = jnp.concatenate(
        [jnp.tile(bq, pack), jnp.tile(bk, pack), jnp.tile(bv, pack)]).reshape(1, -1)

    wq_w = pack * Fk
    wk_w = pack * Fk
    wv_w = pack * Fv
    wtot = wq_w + wk_w + wv_w

    kernel = functools.partial(_qkv_fused_kernel, wq_w=wq_w, wk_w=wk_w)

    # NOTE: outputs stay in x.dtype (f32 here) for exact parity with the
    # PyTorch reference; emitting bf16 would roughly halve output HBM traffic
    # if the downstream attention tolerates it.
    q_pk, k_pk, v_pk = pl.pallas_call(
        kernel,
        out_shape=(
            jax.ShapeDtypeStruct((n_rows, wq_w), x.dtype),
            jax.ShapeDtypeStruct((n_rows, wk_w), x.dtype),
            jax.ShapeDtypeStruct((n_rows, wv_w), x.dtype),
        ),
        grid_spec=pltpu.PrefetchScalarGridSpec(
            num_scalar_prefetch=0,
            grid=grid,
            in_specs=[
                pl.BlockSpec((pm, pack * C), lambda i: (i, 0)),
                pl.BlockSpec((pack * C, wtot), lambda i: (0, 0)),
                pl.BlockSpec((1, wtot), lambda i: (0, 0)),
            ],
            out_specs=[
                pl.BlockSpec((pm, wq_w), lambda i: (i, 0)),
                pl.BlockSpec((pm, wk_w), lambda i: (i, 0)),
                pl.BlockSpec((pm, wv_w), lambda i: (i, 0)),
            ],
        ),
        compiler_params=pltpu.CompilerParams(
            dimension_semantics=("parallel",),
            vmem_limit_bytes=32 * 1024 * 1024,
        ),
    )(x_pk, w_all, b_all)

    def unpack(y_pk, f):
        y = y_pk.reshape(Mp, f)           # contiguous reinterpretation (free)
        if Mp != M:
            y = y[:M]                     # drop zero-padded rows
        return y.reshape(B, D, H, W, f)

    return unpack(q_pk, Fk), unpack(k_pk, Fk), unpack(v_pk, Fv)


def _reference(x, wq, bq, wk, bk, wv, bv):
    xl = jnp.transpose(x, (0, 2, 3, 4, 1))  # [B, D, H, W, C]
    q = jnp.einsum("bdhwc,cf->bdhwf", xl, wq) + bq
    k = jnp.einsum("bdhwc,cf->bdhwf", xl, wk) + bk
    v = jnp.einsum("bdhwc,cf->bdhwf", xl, wv) + bv
    return q, k, v


if __name__ == "__main__":
    # Module config (layer_type='SAME'):
    in_channels = 4
    total_key_filters = 8
    total_value_filters = 8

    key = jax.random.PRNGKey(0)
    kx, kwq, kbq, kwk, kbk, kwv, kbv, kx2 = jax.random.split(key, 8)

    # Conv3d(k=1) weight is [out, in, 1, 1, 1]; we store the transposed
    # [in, out] form the kernel consumes.
    wq = jax.random.normal(kwq, (in_channels, total_key_filters), dtype=jnp.float32) * 0.1
    bq = jax.random.normal(kbq, (total_key_filters,), dtype=jnp.float32) * 0.1
    wk = jax.random.normal(kwk, (in_channels, total_key_filters), dtype=jnp.float32) * 0.1
    bk = jax.random.normal(kbk, (total_key_filters,), dtype=jnp.float32) * 0.1
    wv = jax.random.normal(kwv, (in_channels, total_value_filters), dtype=jnp.float32) * 0.1
    bv = jax.random.normal(kbv, (total_value_filters,), dtype=jnp.float32) * 0.1

    # --- case 1: nicely divisible shape ---------------------------------
    B, C, D, H, W = 2, in_channels, 4, 8, 8
    x = jax.random.normal(kx, (B, C, D, H, W), dtype=jnp.float32)

    q, k, v = compute_qkv_3d_same(x, wq, bq, wk, bk, wv, bv)
    jax.block_until_ready((q, k, v))

    q_r, k_r, v_r = _reference(x, wq, bq, wk, bk, wv, bv)
    assert q.shape == (B, D, H, W, total_key_filters)
    assert k.shape == (B, D, H, W, total_key_filters)
    assert v.shape == (B, D, H, W, total_value_filters)
    assert jnp.allclose(q, q_r, atol=1e-5)
    assert jnp.allclose(k, k_r, atol=1e-5)
    assert jnp.allclose(v, v_r, atol=1e-5)

    # --- case 2: odd shape exercising the padding path ------------------
    B2, D2, H2, W2 = 1, 3, 5, 7
    x2 = jax.random.normal(kx2, (B2, in_channels, D2, H2, W2), dtype=jnp.float32)

    q2, k2, v2 = compute_qkv_3d_same(x2, wq, bq, wk, bk, wv, bv)
    jax.block_until_ready((q2, k2, v2))

    q2_r, k2_r, v2_r = _reference(x2, wq, bq, wk, bk, wv, bv)
    assert q2.shape == (B2, D2, H2, W2, total_key_filters)
    assert jnp.allclose(q2, q2_r, atol=1e-5)
    assert jnp.allclose(k2, k2_r, atol=1e-5)
    assert jnp.allclose(v2, v2_r, atol=1e-5)

    print("KERNEL_OK")
</pallas_src>

<mosaic_0001>
module attributes {stable_mosaic.version = 11 : i64} {
  func.func @_qkv_fused_kernel(%arg0: i32, %arg1: memref<32x64xf32, #tpu.memory_space<vmem>>, %arg2: memref<64x384xf32, #tpu.memory_space<vmem>>, %arg3: memref<1x384xf32, #tpu.memory_space<vmem>>, %arg4: memref<32x128xf32, #tpu.memory_space<vmem>>, %arg5: memref<32x128xf32, #tpu.memory_space<vmem>>, %arg6: memref<32x128xf32, #tpu.memory_space<vmem>>) attributes {dimension_semantics = [#tpu.dimension_semantics<parallel>], iteration_bounds = array<i64: 1>, scalar_prefetch = 0 : i64, scratch_operands = 0 : i64, tpu.core_type = #tpu.core_type<tc>, window_params = [{transform_indices = @transform_0, window_bounds = array<i64: 32, 64>}, {pipeline_mode = #tpu.pipeline_mode<synchronous>, transform_indices = @transform_1, window_bounds = array<i64: 64, 384>}, {pipeline_mode = #tpu.pipeline_mode<synchronous>, transform_indices = @transform_2, window_bounds = array<i64: 1, 384>}, {transform_indices = @transform_3, window_bounds = array<i64: 32, 128>}, {transform_indices = @transform_4, window_bounds = array<i64: 32, 128>}, {transform_indices = @transform_5, window_bounds = array<i64: 32, 128>}]} {
    %c0 = arith.constant 0 : index
    %c0_0 = arith.constant 0 : index
    %0 = vector.load %arg1[%c0, %c0_0] : memref<32x64xf32, #tpu.memory_space<vmem>>, vector<32x64xf32>
    %c0_1 = arith.constant 0 : index
    %c0_2 = arith.constant 0 : index
    %1 = vector.load %arg2[%c0_1, %c0_2] : memref<64x384xf32, #tpu.memory_space<vmem>>, vector<64x384xf32>
    %cst = arith.constant dense<0.000000e+00> : vector<32x384xf32>
    %2 = tpu.matmul %0, %1, %cst {dimension_numbers = #tpu.dot_dimension_numbers<[1], [0], [0], [1], [0, 0, 1, 1], [], []>} : vector<32x64xf32>, vector<64x384xf32>, vector<32x384xf32> -> vector<32x384xf32>
    %c0_3 = arith.constant 0 : index
    %c0_4 = arith.constant 0 : index
    %3 = vector.load %arg3[%c0_3, %c0_4] : memref<1x384xf32, #tpu.memory_space<vmem>>, vector<1x384xf32>
    %4 = vector.broadcast %3 : vector<1x384xf32> to vector<32x384xf32>
    %5 = arith.addf %2, %4 : vector<32x384xf32>
    %6 = vector.extract_strided_slice %5 {offsets = [0, 0], sizes = [32, 128], strides = [1, 1]} : vector<32x384xf32> to vector<32x128xf32>
    %c0_5 = arith.constant 0 : index
    %c0_6 = arith.constant 0 : index
    %7 = vector.load %arg4[%c0_5, %c0_6] : memref<32x128xf32, #tpu.memory_space<vmem>>, vector<32x128xf32>
    tpu.vector_store %arg4[%c0_5, %c0_6], %6 {strides = array<i32>} : memref<32x128xf32, #tpu.memory_space<vmem>>, vector<32x128xf32>,
    %8 = vector.extract_strided_slice %5 {offsets = [0, 128], sizes = [32, 128], strides = [1, 1]} : vector<32x384xf32> to vector<32x128xf32>
    %c0_7 = arith.constant 0 : index
    %c0_8 = arith.constant 0 : index
    %9 = vector.load %arg5[%c0_7, %c0_8] : memref<32x128xf32, #tpu.memory_space<vmem>>, vector<32x128xf32>
    tpu.vector_store %arg5[%c0_7, %c0_8], %8 {strides = array<i32>} : memref<32x128xf32, #tpu.memory_space<vmem>>, vector<32x128xf32>,
    %10 = vector.extract_strided_slice %5 {offsets = [0, 256], sizes = [32, 128], strides = [1, 1]} : vector<32x384xf32> to vector<32x128xf32>
    %c0_9 = arith.constant 0 : index
    %c0_10 = arith.constant 0 : index
    %11 = vector.load %arg6[%c0_9, %c0_10] : memref<32x128xf32, #tpu.memory_space<vmem>>, vector<32x128xf32>
    tpu.vector_store %arg6[%c0_9, %c0_10], %10 {strides = array<i32>} : memref<32x128xf32, #tpu.memory_space<vmem>>, vector<32x128xf32>,
    return
  }
  func.func @transform_0(%arg0: i32) -> (i32, i32) {
    %c0_i32 = arith.constant 0 : i32
    %c0_i32_0 = arith.constant 0 : i32
    return %arg0, %c0_i32 : i32, i32
  }
  func.func @transform_1(%arg0: i32) -> (i32, i32) {
    %c0_i32 = arith.constant 0 : i32
    %c0_i32_0 = arith.constant 0 : i32
    %c0_i32_1 = arith.constant 0 : i32
    return %c0_i32, %c0_i32_0 : i32, i32
  }
  func.func @transform_2(%arg0: i32) -> (i32, i32) {
    %c0_i32 = arith.constant 0 : i32
    %c0_i32_0 = arith.constant 0 : i32
    %c0_i32_1 = arith.constant 0 : i32
    return %c0_i32, %c0_i32_0 : i32, i32
  }
  func.func @transform_3(%arg0: i32) -> (i32, i32) {
    %c0_i32 = arith.constant 0 : i32
    %c0_i32_0 = arith.constant 0 : i32
    return %arg0, %c0_i32 : i32, i32
  }
  func.func @transform_4(%arg0: i32) -> (i32, i32) {
    %c0_i32 = arith.constant 0 : i32
    %c0_i32_0 = arith.constant 0 : i32
    return %arg0, %c0_i32 : i32, i32
  }
  func.func @transform_5(%arg0: i32) -> (i32, i32) {
    %c0_i32 = arith.constant 0 : i32
    %c0_i32_0 = arith.constant 0 : i32
    return %arg0, %c0_i32 : i32, i32
  }
}

</mosaic_0001>

<llo_original>
// kernel: tile.18
$region0: #{tile.18}
  #allocation0 [shape = 's32[1]{0}', space=sflag, size = 0x4, scoped, tag = 'scoped memory for tile.18']
  %s0 = inlined_call_operand.vmem [shape: f32[8], index: 0, kind: input, shape index: {}]
  %s1 = inlined_call_operand.vmem [shape: f32[16,8], index: 1, kind: output, shape index: {}]
  // Predicated region
  $region2: #{tile.18} parent=0 // pred_check
    _
  $region3: #{tile.18} parent=0 // pred_check_branch
    %3 = sbr.rel (0) target = $region5
  $region4: #{tile.18} parent=0 // pred_region
    _
  $region5: #{tile.18} parent=0 // pred_fallthru
    _
  %v4 = vld [vmem:[%s0] ss:$0 sm:$0xff]
  %5 = vst [vmem:[%s1] sm:$0xff] %v4
  %s6 = scalar_lea.vmem %s1, 8
  %7 = vst [vmem:[%s6] sm:$0xff] %v4

// kernel: tile.19
$region0: #{tile.19}
  %s0 = inlined_call_operand.vmem [shape: f32[16,8], index: 0, kind: input, shape index: {}]
  %s1 = inlined_call_operand.vmem [shape: f32[128], index: 1, kind: output, shape index: {}]
  $region1: #{tile.19} parent=0
    #allocation0 [shape = 'u8[4096]{0}', space=vmem, size = 0x1000, scoped, tag = 'scoped mem for output reshape']
    %v2 = vld [vmem:[%s0] sm:$0x1]
    %vm3 = vcmask 64512
    %4 = vst.msk [vmem:[#allocation0] sm:$0x1] %vm3, %v2
    %s5 = scalar_lea.vmem %s0, 15
    %v6 = vld [vmem:[%s5] sm:$0x1]
    %7 = vrot.lane.b32.xlu0 %v6, 120
    %v8 = vpop.permute.xlu0 %7
    %vm9 = vcmask 1048512
    %10 = vst.msk [vmem:[#allocation0] sm:$0x1] %vm9, %v8
    %s11 = scalar_lea.vmem %s0, 14
    %v12 = vld [vmem:[%s11] sm:$0x1]
    %13 = vrot.lane.b32.xlu0 %v12, 112
    %v14 = vpop.permute.xlu0 %13
    %vm15 = vcmask 982912
    %16 = vst.msk [vmem:[#allocation0] sm:$0x1] %vm15, %v14
    %s17 = scalar_lea.vmem %s0, 13
    %v18 = vld [vmem:[%s17] sm:$0x1]
    %19 = vrot.lane.b32.xlu0 %v18, 104
    %v20 = vpop.permute.xlu0 %19
    %vm21 = vcmask 917312
    %22 = vst.msk [vmem:[#allocation0] sm:$0x1] %vm21, %v20
    %s23 = scalar_lea.vmem %s0, 12
    %v24 = vld [vmem:[%s23] sm:$0x1]
    %25 = vrot.lane.b32.xlu0 %v24, 96
    %v26 = vpop.permute.xlu0 %25
    %vm27 = vcmask 851712
    %28 = vst.msk [vmem:[#allocation0] sm:$0x1] %vm27, %v26
    %s29 = scalar_lea.vmem %s0, 11
    %v30 = vld [vmem:[%s29] sm:$0x1]
    %31 = vrot.lane.b32.xlu0 %v30, 88
    %v32 = vpop.permute.xlu0 %31
    %vm33 = vcmask 786112
    %34 = vst.msk [vmem:[#allocation0] sm:$0x1] %vm33, %v32
    %s35 = scalar_lea.vmem %s0, 10
    %v36 = vld [vmem:[%s35] sm:$0x1]
    %37 = vrot.lane.b32.xlu0 %v36, 80
    %v38 = vpop.permute.xlu0 %37
    %vm39 = vcmask 720512
    %40 = vst.msk [vmem:[#allocation0] sm:$0x1] %vm39, %v38
    %s41 = scalar_lea.vmem %s0, 9
    %v42 = vld [vmem:[%s41] sm:$0x1]
    %43 = vrot.lane.b32.xlu0 %v42, 72
    %v44 = vpop.permute.xlu0 %43
    %vm45 = vcmask 654912
    %46 = vst.msk [vmem:[#allocation0] sm:$0x1] %vm45, %v44
    %s47 = scalar_lea.vmem %s0, 8
    %v48 = vld [vmem:[%s47] sm:$0x1]
    %49 = vrot.lane.b32.xlu0 %v48, 64
    %v50 = vpop.permute.xlu0 %49
    %vm51 = vcmask 589312
    %52 = vst.msk [vmem:[#allocation0] sm:$0x1] %vm51, %v50
    %s53 = scalar_lea.vmem %s0, 7
    %v54 = vld [vmem:[%s53] sm:$0x1]
    %55 = vrot.lane.b32.xlu0 %v54, 56
    %v56 = vpop.permute.xlu0 %55
    %vm57 = vcmask 523712
    %58 = vst.msk [vmem:[#allocation0] sm:$0x1] %vm57, %v56
    %s59 = scalar_lea.vmem %s0, 6
    %v60 = vld [vmem:[%s59] sm:$0x1]
    %61 = vrot.lane.b32.xlu0 %v60, 48
    %v62 = vpop.permute.xlu0 %61
    %vm63 = vcmask 458112
    %64 = vst.msk [vmem:[#allocation0] sm:$0x1] %vm63, %v62
    %s65 = scalar_lea.vmem %s0, 5
    %v66 = vld [vmem:[%s65] sm:$0x1]
    %67 = vrot.lane.b32.xlu0 %v66, 40
    %v68 = vpop.permute.xlu0 %67
    %vm69 = vcmask 392512
    %70 = vst.msk [vmem:[#allocation0] sm:$0x1] %vm69, %v68
    %s71 = scalar_lea.vmem %s0, 4
    %v72 = vld [vmem:[%s71] sm:$0x1]
    %73 = vrot.lane.b32.xlu0 %v72, 32
    %v74 = vpop.permute.xlu0 %73
    %vm75 = vcmask 326912
    %76 = vst.msk [vmem:[#allocation0] sm:$0x1] %vm75, %v74
    %s77 = scalar_lea.vmem %s0, 3
    %v78 = vld [vmem:[%s77] sm:$0x1]
    %79 = vrot.lane.b32.xlu0 %v78, 24
    %v80 = vpop.permute.xlu0 %79
    %vm81 = vcmask 261312
    %82 = vst.msk [vmem:[#allocation0] sm:$0x1] %vm81, %v80
    %s83 = scalar_lea.vmem %s0, 2
    %v84 = vld [vmem:[%s83] sm:$0x1]
    %85 = vrot.lane.b32.xlu0 %v84, 16
    %v86 = vpop.permute.xlu0 %85
    %vm87 = vcmask 195712
    %88 = vst.msk [vmem:[#allocation0] sm:$0x1] %vm87, %v86
    %s89 = scalar_lea.vmem %s0, 1
    %v90 = vld [vmem:[%s89] sm:$0x1]
    %91 = vrot.lane.b32.xlu0 %v90, 8
    %v92 = vpop.permute.xlu0 %91
    %vm93 = vcmask 130112
    %94 = vst.msk [vmem:[#allocation0] sm:$0x1] %vm93, %v92
    %s96 = sshll.u32 1, 1
    %s97 = ssub.s32 %s96, 1
    %v99 = vld [vmem:[#allocation0] sm:%s97]
    %s100 = sshll.u32 1, 1
    %s101 = ssub.s32 %s100, 1
    %102 = vst [vmem:[%s1] sm:%s101] %v99

// kernel: compute_qkv_3d_same.1
$region0: #{compute_qkv_3d_same.1}
  #allocation0 [shape = 'u32[]', space=smem, size = 0x4, offset = 0x4, fixed_abs, tag = 'smem constant byte address 0x4 - core index']
  #allocation1 [shape = 'u32[144,128]{1,0:T(1,128)}', space=vmem, size = 0x12000, scoped, tag = 'internal scratch']
  %s0 = inlined_call_operand.vmem [shape: f32[32,64], index: 0, kind: input, shape index: {}]
  %s1 = inlined_call_operand.vmem [shape: f32[64,384], index: 1, kind: input, shape index: {}]
  %s2 = inlined_call_operand.vmem [shape: f32[1,384], index: 2, kind: input, shape index: {}]
  %s3 = inlined_call_operand.vmem [shape: f32[32,128], index: 3, kind: output, shape index: {0}]
  %s4 = inlined_call_operand.vmem [shape: f32[32,128], index: 4, kind: output, shape index: {1}]
  %s5 = inlined_call_operand.vmem [shape: f32[32,128], index: 5, kind: output, shape index: {2}]
  %6 = xla_tuple %s3, %s4, %s5
  %s7 = sld [smem:[#allocation0]]
  $region38: #{compute_qkv_3d_same.1} parent=0
    _
  %s9 = ssub.s32 1, %s7
  %s10 = scalar_select 0, %s9, %s7
  // Predicated region
  $region2: #{compute_qkv_3d_same.1} parent=0 // pred_check
    _
  $region3: #{compute_qkv_3d_same.1} parent=0 // pred_check_branch
    %12 = sbr.rel (0) target = $region5
  $region4: #{compute_qkv_3d_same.1} parent=0 // pred_region
    _
  $region5: #{compute_qkv_3d_same.1} parent=0 // pred_fallthru
    _
  // Predicated region
  $region6: #{compute_qkv_3d_same.1} parent=0 // pred_check
    _
  $region7: #{compute_qkv_3d_same.1} parent=0 // pred_check_branch
    %14 = sbr.rel (0) target = $region9
  $region8: #{compute_qkv_3d_same.1} parent=0 // pred_region
    _
  $region9: #{compute_qkv_3d_same.1} parent=0 // pred_fallthru
    _
  // Predicated region
  $region10: #{compute_qkv_3d_same.1} parent=0 // pred_check
    _
  $region11: #{compute_qkv_3d_same.1} parent=0 // pred_check_branch
    %16 = sbr.rel (0) target = $region13
  $region12: #{compute_qkv_3d_same.1} parent=0 // pred_region
    _
  $region13: #{compute_qkv_3d_same.1} parent=0 // pred_fallthru
    _
  %v17 = vld [vmem:[%s0] sm:$0xff]
  %v18 = vld [vmem:[%s0 + $0x8] sm:$0xff]
  %v19 = vld [vmem:[%s0 + $0x10] sm:$0xff]
  %v20 = vld [vmem:[%s0 + $0x18] sm:$0xff]
  %v21 = vld [vmem:[%s1] sm:$0xff]
  %v22 = vld [vmem:[%s1 + $0x8] sm:$0xff]
  %v23 = vld [vmem:[%s1 + $0x10] sm:$0xff]
  %v24 = vld [vmem:[%s1 + $0x18] sm:$0xff]
  %v25 = vld [vmem:[%s1 + $0x20] sm:$0xff]
  %v26 = vld [vmem:[%s1 + $0x28] sm:$0xff]
  %v27 = vld [vmem:[%s1 + $0x30] sm:$0xff]
  %v28 = vld [vmem:[%s1 + $0x38] sm:$0xff]
  %v29 = vld [vmem:[%s1 + $0x40] sm:$0xff]
  %v30 = vld [vmem:[%s1 + $0x48] sm:$0xff]
  %v31 = vld [vmem:[%s1 + $0x50] sm:$0xff]
  %v32 = vld [vmem:[%s1 + $0x58] sm:$0xff]
  %v33 = vld [vmem:[%s1 + $0x60] sm:$0xff]
  %v34 = vld [vmem:[%s1 + $0x68] sm:$0xff]
  %v35 = vld [vmem:[%s1 + $0x70] sm:$0xff]
  %v36 = vld [vmem:[%s1 + $0x78] sm:$0xff]
  %v37 = vld [vmem:[%s1 + $0x80] sm:$0xff]
  %v38 = vld [vmem:[%s1 + $0x88] sm:$0xff]
  %v39 = vld [vmem:[%s1 + $0x90] sm:$0xff]
  %v40 = vld [vmem:[%s1 + $0x98] sm:$0xff]
  %v41 = vld [vmem:[%s1 + $0xa0] sm:$0xff]
  %v42 = vld [vmem:[%s1 + $0xa8] sm:$0xff]
  %v43 = vld [vmem:[%s1 + $0xb0] sm:$0xff]
  %v44 = vld [vmem:[%s1 + $0xb8] sm:$0xff]
  %v45 = vld [vmem:[%s2] sm:$0x7]
  %v47 = vlaneseq
  %v48 = vshrl.u32 %v47, 7
  %v49 = vsub.s32 0, %v48
  %v50 = vrot.slane %v45, %v49
  %v51 = vlaneseq
  %v52 = vshrl.u32 %v51, 7
  %v53 = vsub.s32 1, %v52
  %v54 = vrot.slane %v45, %v53
  %v55 = vlaneseq
  %v56 = vshrl.u32 %v55, 7
  %v57 = vsub.s32 2, %v56
  %v58 = vrot.slane %v45, %v57
  %vm62 = vcmask 523264
  %v64 = vsel %vm62, %v17, 0
  %v67 = vsel %vm62, %v18, 0
  %v70 = vsel %vm62, %v19, 0
  %v73 = vsel %vm62, %v20, 0
  %75 = vmatprep.subr.mxu0 0.0
  %76 = vmatpush1.msra.mxu0 0.0
  %77 = vmatprep.subr.mxu0 0.0
  %78 = vmatpush1.msra.mxu0 0.0
  %79 = vmatprep.subr.mxu0 0.0
  %80 = vmatpush1.msra.mxu0 0.0
  %81 = vmatprep.subr.mxu0 0.0
  %82 = vmatpush1.msra.mxu0 0.0
  %83 = vmatprep.subr.mxu0 0.0
  %84 = vmatpush1.msra.mxu0 0.0
  %85 = vmatprep.subr.mxu0 0.0
  %86 = vmatpush1.msra.mxu0 0.0
  %87 = vmatprep.subr.mxu0 0.0
  %88 = vmatpush1.msra.mxu0 0.0
  %89 = vmatprep.subr.mxu0 0.0
  %90 = vmatpush1.msra.mxu0 0.0
  %91 = vmatprep.subr.mxu0 %v43
  %92 = vmatpush1.msra.mxu0 %v42
  %93 = vmatprep.subr.mxu0 %v40
  %94 = vmatpush1.msra.mxu0 %v39
  %95 = vmatprep.subr.mxu0 %v37
  %96 = vmatpush1.msra.mxu0 %v36
  %97 = vmatprep.subr.mxu0 %v34
  %98 = vmatpush1.msra.mxu0 %v33
  %99 = vmatprep.subr.mxu0 %v31
  %100 = vmatpush1.msra.mxu0 %v30
  %101 = vmatprep.subr.mxu0 %v28
  %102 = vmatpush1.msra.mxu0 %v27
  %103 = vmatprep.subr.mxu0 %v25
  %104 = vmatpush1.msra.mxu0 %v24
  %105 = vmatprep.subr.mxu0 %v22
  %106 = vmatpush1.msra.mxu0 %v21
  %107 = vmatprep.subr.mxu0 0.0
  %108 = vmatpush2.msra.mxu0 0.0
  %109 = vmatprep.subr.mxu0 0.0
  %110 = vmatpush2.msra.mxu0 0.0
  %111 = vmatprep.subr.mxu0 0.0
  %112 = vmatpush2.msra.mxu0 0.0
  %113 = vmatprep.subr.mxu0 0.0
  %114 = vmatpush2.msra.mxu0 0.0
  %115 = vmatprep.subr.mxu0 0.0
  %116 = vmatpush2.msra.mxu0 0.0
  %117 = vmatprep.subr.mxu0 0.0
  %118 = vmatpush2.msra.mxu0 0.0
  %119 = vmatprep.subr.mxu0 0.0
  %120 = vmatpush2.msra.mxu0 0.0
  %121 = vmatprep.subr.mxu0 0.0
  %122 = vmatpush2.msra.mxu0 0.0
  %123 = vmatprep.subr.mxu0 0.0
  %124 = vmatpush2.msra.mxu0 0.0
  %125 = vmatprep.subr.mxu0 0.0
  %126 = vmatpush2.msra.mxu0 0.0
  %127 = vmatprep.subr.mxu0 0.0
  %128 = vmatpush2.msra.mxu0 0.0
  %129 = vmatprep.subr.mxu0 0.0
  %130 = vmatpush2.msra.mxu0 0.0
  %131 = vmatprep.subr.mxu0 0.0
  %132 = vmatpush2.msra.mxu0 0.0
  %133 = vmatprep.subr.mxu0 0.0
  %134 = vmatpush2.msra.mxu0 0.0
  %135 = vmatprep.subr.mxu0 0.0
  %136 = vmatpush2.msra.mxu0 0.0
  %137 = vmatprep.subr.mxu0 0.0
  %138 = vmatpush2.msra.mxu0 0.0
  %139 = vmatprep.mubr.f32.mxu0 0.0
  %140 = vmatmul.mubr.f32.gmra.mxu0 %v64
  %v141 = vpop.f32.mrf.mxu0
  %v142 = vadd.f32 %v50, %v141
  %v143 = vpop.f32.mrf.mxu0
  %v144 = vadd.f32 %v54, %v143
  %145 = vmatprep.mubr.f32.mxu0 0.0
  %146 = vmatmul.mubr.f32.gmra.mxu0 %v67
  %v147 = vpop.f32.mrf.mxu0
  %v148 = vadd.f32 %v50, %v147
  %v149 = vpop.f32.mrf.mxu0
  %v150 = vadd.f32 %v54, %v149
  %151 = vmatprep.mubr.f32.mxu0 0.0
  %152 = vmatmul.mubr.f32.gmra.mxu0 %v70
  %v153 = vpop.f32.mrf.mxu0
  %v154 = vadd.f32 %v50, %v153
  %v155 = vpop.f32.mrf.mxu0
  %v156 = vadd.f32 %v54, %v155
  %157 = vmatprep.mubr.f32.mxu0 0.0
  %158 = vmatmul.mubr.f32.gmra.mxu0 %v73
  %v159 = vpop.f32.mrf.mxu0
  %v160 = vadd.f32 %v50, %v159
  %v161 = vpop.f32.mrf.mxu0
  %v162 = vadd.f32 %v54, %v161
  %163 = vdwg.mxu0
  %164 = vmatprep.subr.mxu0 0.0
  %165 = vmatpush1.msra.mxu0 0.0
  %166 = vmatprep.subr.mxu0 0.0
  %167 = vmatpush1.msra.mxu0 0.0
  %168 = vmatprep.subr.mxu0 0.0
  %169 = vmatpush1.msra.mxu0 0.0
  %170 = vmatprep.subr.mxu0 0.0
  %171 = vmatpush1.msra.mxu0 0.0
  %172 = vmatprep.subr.mxu0 0.0
  %173 = vmatpush1.msra.mxu0 0.0
  %174 = vmatprep.subr.mxu0 0.0
  %175 = vmatpush1.msra.mxu0 0.0
  %176 = vmatprep.subr.mxu0 0.0
  %177 = vmatpush1.msra.mxu0 0.0
  %178 = vmatprep.subr.mxu0 0.0
  %179 = vmatpush1.msra.mxu0 0.0
  %180 = vmatprep.subr.mxu0 0.0
  %181 = vmatpush1.msra.mxu0 %v44
  %182 = vmatprep.subr.mxu0 0.0
  %183 = vmatpush1.msra.mxu0 %v41
  %184 = vmatprep.subr.mxu0 0.0
  %185 = vmatpush1.msra.mxu0 %v38
  %186 = vmatprep.subr.mxu0 0.0
  %187 = vmatpush1.msra.mxu0 %v35
  %188 = vmatprep.subr.mxu0 0.0
  %189 = vmatpush1.msra.mxu0 %v32
  %190 = vmatprep.subr.mxu0 0.0
  %191 = vmatpush1.msra.mxu0 %v29
  %192 = vmatprep.subr.mxu0 0.0
  %193 = vmatpush1.msra.mxu0 %v26
  %194 = vmatprep.subr.mxu0 0.0
  %195 = vmatpush1.msra.mxu0 %v23
  %196 = vmatprep.subr.mxu0 0.0
  %197 = vmatpush2.msra.mxu0 0.0
  %198 = vmatprep.subr.mxu0 0.0
  %199 = vmatpush2.msra.mxu0 0.0
  %200 = vmatprep.subr.mxu0 0.0
  %201 = vmatpush2.msra.mxu0 0.0
  %202 = vmatprep.subr.mxu0 0.0
  %203 = vmatpush2.msra.mxu0 0.0
  %204 = vmatprep.subr.mxu0 0.0
  %205 = vmatpush2.msra.mxu0 0.0
  %206 = vmatprep.subr.mxu0 0.0
  %207 = vmatpush2.msra.mxu0 0.0
  %208 = vmatprep.subr.mxu0 0.0
  %209 = vmatpush2.msra.mxu0 0.0
  %210 = vmatprep.subr.mxu0 0.0
  %211 = vmatpush2.msra.mxu0 0.0
  %212 = vmatprep.subr.mxu0 0.0
  %213 = vmatpush2.msra.mxu0 0.0
  %214 = vmatprep.subr.mxu0 0.0
  %215 = vmatpush2.msra.mxu0 0.0
  %216 = vmatprep.subr.mxu0 0.0
  %217 = vmatpush2.msra.mxu0 0.0
  %218 = vmatprep.subr.mxu0 0.0
  %219 = vmatpush2.msra.mxu0 0.0
  %220 = vmatprep.subr.mxu0 0.0
  %221 = vmatpush2.msra.mxu0 0.0
  %222 = vmatprep.subr.mxu0 0.0
  %223 = vmatpush2.msra.mxu0 0.0
  %224 = vmatprep.subr.mxu0 0.0
  %225 = vmatpush2.msra.mxu0 0.0
  %226 = vmatprep.subr.mxu0 0.0
  %227 = vmatpush2.msra.mxu0 0.0
  %228 = vmatprep.mubr.f32.mxu0 0.0
  %229 = vmatmul.mubr.f32.gmra.mxu0 %v64
  %v230 = vpop.f32.mrf.mxu0
  %v231 = vadd.f32 %v58, %v230
  %v232 = vpop.f32.mrf.mxu0
  %233 = vmatprep.mubr.f32.mxu0 0.0
  %234 = vmatmul.mubr.f32.gmra.mxu0 %v67
  %v235 = vpop.f32.mrf.mxu0
  %v236 = vadd.f32 %v58, %v235
  %v237 = vpop.f32.mrf.mxu0
  %238 = vmatprep.mubr.f32.mxu0 0.0
  %239 = vmatmul.mubr.f32.gmra.mxu0 %v70
  %v240 = vpop.f32.mrf.mxu0
  %v241 = vadd.f32 %v58, %v240
  %v242 = vpop.f32.mrf.mxu0
  %243 = vmatprep.mubr.f32.mxu0 0.0
  %244 = vmatmul.mubr.f32.gmra.mxu0 %v73
  %v245 = vpop.f32.mrf.mxu0
  %v246 = vadd.f32 %v58, %v245
  %v247 = vpop.f32.mrf.mxu0
  %248 = vdwg.mxu0
  %249 = vst [vmem:[%s3] sm:$0xff] %v142
  %250 = vst [vmem:[%s3 + $0x8] sm:$0xff] %v148
  %251 = vst [vmem:[%s3 + $0x10] sm:$0xff] %v154
  %252 = vst [vmem:[%s3 + $0x18] sm:$0xff] %v160
  %253 = vst [vmem:[%s4] sm:$0xff] %v144
  %254 = vst [vmem:[%s4 + $0x8] sm:$0xff] %v150
  %255 = vst [vmem:[%s4 + $0x10] sm:$0xff] %v156
  %256 = vst [vmem:[%s4 + $0x18] sm:$0xff] %v162
  %257 = vst [vmem:[%s5] sm:$0xff] %v231
  %258 = vst [vmem:[%s5 + $0x8] sm:$0xff] %v236
  %259 = vst [vmem:[%s5 + $0x10] sm:$0xff] %v241
  %260 = vst [vmem:[%s5 + $0x18] sm:$0xff] %v246
  // Predicated region
  $region14: #{compute_qkv_3d_same.1} parent=0 // pred_check
    _
  $region15: #{compute_qkv_3d_same.1} parent=0 // pred_check_branch
    %262 = sbr.rel (0) target = $region17
  $region16: #{compute_qkv_3d_same.1} parent=0 // pred_region
    _
  $region17: #{compute_qkv_3d_same.1} parent=0 // pred_fallthru
    _
  // Predicated region
  $region18: #{compute_qkv_3d_same.1} parent=0 // pred_check
    _
  $region19: #{compute_qkv_3d_same.1} parent=0 // pred_check_branch
    %264 = sbr.rel (0) target = $region21
  $region20: #{compute_qkv_3d_same.1} parent=0 // pred_region
    _
  $region21: #{compute_qkv_3d_same.1} parent=0 // pred_fallthru
    _
  // Predicated region
  $region22: #{compute_qkv_3d_same.1} parent=0 // pred_check
    _
  $region23: #{compute_qkv_3d_same.1} parent=0 // pred_check_branch
    %266 = sbr.rel (0) target = $region25
  $region24: #{compute_qkv_3d_same.1} parent=0 // pred_region
    _
  $region25: #{compute_qkv_3d_same.1} parent=0 // pred_fallthru
    _
  // Predicated region
  $region26: #{compute_qkv_3d_same.1} parent=0 // pred_check
    _
  $region27: #{compute_qkv_3d_same.1} parent=0 // pred_check_branch
    %268 = sbr.rel (0) target = $region29
  $region28: #{compute_qkv_3d_same.1} parent=0 // pred_region
    _
  $region29: #{compute_qkv_3d_same.1} parent=0 // pred_fallthru
    _
  // Predicated region
  $region30: #{compute_qkv_3d_same.1} parent=0 // pred_check
    _
  $region31: #{compute_qkv_3d_same.1} parent=0 // pred_check_branch
    %270 = sbr.rel (0) target = $region33
  $region32: #{compute_qkv_3d_same.1} parent=0 // pred_region
    _
  $region33: #{compute_qkv_3d_same.1} parent=0 // pred_fallthru
    _
  // Predicated region
  $region34: #{compute_qkv_3d_same.1} parent=0 // pred_check
    _
  $region35: #{compute_qkv_3d_same.1} parent=0 // pred_check_branch
    %272 = sbr.rel (0) target = $region37
  $region36: #{compute_qkv_3d_same.1} parent=0 // pred_region
    _
  $region37: #{compute_qkv_3d_same.1} parent=0 // pred_fallthru
    _

</llo_original>
